<compile_context>
chip_gen: v7x
topology: tpu7x:2x2x1
jax: 0.10.0
libtpu: 0.0.40
codegen_flags: <defaults>
</compile_context>

<pallas_src>
import jax
import jax.numpy as jnp
import numpy as np
from jax.experimental import pallas as pl
from jax.experimental.pallas import tpu as pltpu

# ---- problem sizes (consistent with the module: heads=4, dim_head=8) --------
B, P, N = 2, 2, 8            # batch, patch groups, tokens per group
DIM = 32                     # model dim
HEADS = 4
DIM_HEAD = 8
INNER = HEADS * DIM_HEAD     # 32
SCALE = DIM_HEAD ** -0.5

R = B * P * N                # 32   tokens handled per call
S = HEADS * R                # 128  stacked (head, b, p, n) rows
HD = HEADS * DIM             # 128  block-diagonal feature width
LANE = 128                   # lane-dense output width (DIM zero-padded to 128)


def attention_kernel(x_ref, rep_ref, qk_ref, wvo_ref, bias_ref, sel_ref,
                     amask_ref, o_ref):
    # x_ref:     (R, DIM)    tokens
    # rep_ref:   (DIM, HD)   [I | I | I | I]  lane-replication constant
    # qk_ref:    (HD, HD)    blockdiag_h( scale * Wq_h @ Wk_h^T )
    # wvo_ref:   (HD, LANE)  rows h*DIM:(h+1)*DIM = Wv_h @ Wout_h  (lanes 0-pad)
    # bias_ref:  (1, LANE)   output-projection bias (lanes 0-pad)
    # sel_ref:   (S, HD)     0/1 block-diagonal selector (DIM x DIM blocks)
    # amask_ref: (S, S)      additive mask: 0 inside each (b,p,head) N-block, -1e30 outside
    # o_ref:     (R, LANE)
    x = x_ref[...]

    # Block-diagonal replica of x: row h*R + r carries x[r] in lanes
    # [h*DIM, (h+1)*DIM).  Sublane tiling (vreg copies) + lane replication on
    # the idle MXU + constant 0/1 select -- no lane rotates, no narrow slices.
    x_sub = jnp.concatenate([x] * HEADS, axis=0)                        # (S, DIM)
    x_bd = jnp.dot(x_sub, rep_ref[...],
                   preferred_element_type=jnp.float32) * sel_ref[...]   # (S, HD)

    # W_out folded into V (host side): vw[h*R+r, :] = v_h(x_r) @ Wout_h.
    # Data-ready before the score/softmax chain, so it overlaps it.
    vw = jnp.dot(x_bd, wvo_ref[...], preferred_element_type=jnp.float32)  # (S, LANE)

    # scores[h*R+r, h*R+r'] = scale * q_h(x_r) . k_h(x_r')   (QK folded host side).
    t = jnp.dot(x_bd, qk_ref[...], preferred_element_type=jnp.float32)    # (S, HD)
    scores = jax.lax.dot_general(t, x_bd, (((1,), (1,)), ((), ())),
                                 preferred_element_type=jnp.float32)      # (S, S)
    scores = scores + amask_ref[...]       # precomputed additive block-diag mask

    # 128-lane softmax; masked entries underflow to exactly 0.
    m = jnp.max(scores, axis=-1, keepdims=True)
    e = jnp.exp(scores - m)
    attn = e / jnp.sum(e, axis=-1, keepdims=True)          # exact normalization

    # One attn @ (V Wout) matmul for every (b, p, head) at once.
    out = jnp.dot(attn, vw, preferred_element_type=jnp.float32)           # (S, LANE)

    # Head concat + output projection collapse into a sum over the 4 sublane
    # blocks; seed the accumulator with the bias (no zero-fill pass).
    y = out[0:R, :] + bias_ref[...]
    for h in range(1, HEADS):
        y = y + out[h * R:(h + 1) * R, :]
    o_ref[...] = y.astype(o_ref.dtype)     # unmasked lane-dense (R, LANE) store


def prepare_attention_params(w_qkv, w_out, b_out):
    """One-time (model-load) constant preprocessing.

    Apply exactly ONCE to the raw weights: it folds the softmax scale and the
    Wq@Wk^T / Wv@Wout compositions, so re-applying it would double-transform.
    Done in numpy/f64 so it costs nothing per forward call.
    """
    w_qkv = np.asarray(w_qkv, dtype=np.float64)     # (DIM, 3*INNER)
    w_out = np.asarray(w_out, dtype=np.float64)     # (INNER, DIM)
    b_out = np.asarray(b_out, dtype=np.float64)     # (DIM,)

    qk = np.zeros((HD, HD), np.float64)
    wvo = np.zeros((HD, LANE), np.float64)
    for h in range(HEADS):
        cq = slice(0 * INNER + h * DIM_HEAD, 0 * INNER + (h + 1) * DIM_HEAD)
        ck = slice(1 * INNER + h * DIM_HEAD, 1 * INNER + (h + 1) * DIM_HEAD)
        cv = slice(2 * INNER + h * DIM_HEAD, 2 * INNER + (h + 1) * DIM_HEAD)
        rows = slice(h * DIM, (h + 1) * DIM)
        qk[rows, rows] = SCALE * (w_qkv[:, cq] @ w_qkv[:, ck].T)
        wvo[rows, :DIM] = w_qkv[:, cv] @ w_out[h * DIM_HEAD:(h + 1) * DIM_HEAD, :]

    bias = np.zeros((1, LANE), np.float64)
    bias[0, :DIM] = b_out

    rep = np.tile(np.eye(DIM), (1, HEADS))                              # (DIM, HD)
    sel = (np.arange(S)[:, None] // R ==
           np.arange(HD)[None, :] // DIM).astype(np.float64)            # (S, HD)
    grp = np.arange(S) // N                          # (head, b, p) group per row
    amask = np.where(grp[:, None] == grp[None, :], 0.0, -1e30)          # (S, S)

    f32 = lambda a: jnp.asarray(a, dtype=jnp.float32)
    return {"rep": f32(rep), "qk": f32(qk), "wvo": f32(wvo), "bias": f32(bias),
            "sel": f32(sel), "amask": f32(amask)}


@jax.jit
def attention_pallas(x, params):
    b, p, n, d = x.shape
    assert (b, p, n, d) == (B, P, N, DIM)
    x2 = x.reshape(R, d)

    vmem = pl.BlockSpec(memory_space=pltpu.MemorySpace.VMEM)
    y = pl.pallas_call(
        attention_kernel,
        out_shape=jax.ShapeDtypeStruct((R, LANE), x.dtype),
        in_specs=[vmem] * 7,
        out_specs=vmem,
        # For real MobileViT patch counts: add a grid over groups here with
        # per-step x/out blocks, grid-invariant weight/mask blocks, and
        # dimension_semantics=("parallel",) so v7x's two cores split the work.
    )(x2, params["rep"], params["qk"], params["wvo"], params["bias"],
      params["sel"], params["amask"])
    return y[:, :d].reshape(b, p, n, d)


def attention_reference(x, w_qkv, w_out, b_out):
    """Plain-JAX reference mirroring the PyTorch forward (eval mode)."""
    b, p, n, d = x.shape
    qkv = jnp.einsum("bpnd,de->bpne", x, w_qkv)
    q, k, v = jnp.split(qkv, 3, axis=-1)

    def split_heads(t):  # 'b p n (h d) -> b p h n d'
        return t.reshape(b, p, n, HEADS, DIM_HEAD).transpose(0, 1, 3, 2, 4)

    q, k, v = map(split_heads, (q, k, v))
    dots = jnp.einsum("bphnd,bphmd->bphnm", q, k) * SCALE
    attn = jax.nn.softmax(dots, axis=-1)
    out = jnp.einsum("bphnm,bphmd->bphnd", attn, v)
    out = out.transpose(0, 1, 3, 2, 4).reshape(b, p, n, INNER)
    return jnp.einsum("bpni,id->bpnd", out, w_out) + b_out


if __name__ == "__main__":
    key = jax.random.PRNGKey(0)
    kx, kq, ko, kb = jax.random.split(key, 4)

    x = jax.random.normal(kx, (B, P, N, DIM), dtype=jnp.float32)
    # Deterministic synthetic parameters (shapes implied by the module __init__).
    w_qkv = jax.random.normal(kq, (DIM, 3 * INNER), dtype=jnp.float32) * 0.2
    w_out = jax.random.normal(ko, (INNER, DIM), dtype=jnp.float32) * 0.2
    b_out = jax.random.normal(kb, (DIM,), dtype=jnp.float32) * 0.2

    # One-time model-load preprocessing (hoisted out of the per-call wrapper).
    params = prepare_attention_params(w_qkv, w_out, b_out)

    y = attention_pallas(x, params)
    y = jax.block_until_ready(y)

    y_ref = attention_reference(x, w_qkv, w_out, b_out)
    # Tolerance covers TPU default matmul-precision behaviour of the plain-JAX
    # reference and the constant weight-composition folds (Wq@Wk^T, Wv@Wout
    # reassociation).  The approximate-reciprocal softmax has been removed, so
    # no extra slack is needed for it.
    np.testing.assert_allclose(np.asarray(y), np.asarray(y_ref),
                               rtol=2e-3, atol=2e-3)
    print("KERNEL_OK")
</pallas_src>

<mosaic_0001>
module attributes {stable_mosaic.version = 11 : i64} {
  func.func @attention_kernel(%arg0: memref<32x32xf32, #tpu.memory_space<vmem>>, %arg1: memref<32x128xf32, #tpu.memory_space<vmem>>, %arg2: memref<128x128xf32, #tpu.memory_space<vmem>>, %arg3: memref<128x128xf32, #tpu.memory_space<vmem>>, %arg4: memref<1x128xf32, #tpu.memory_space<vmem>>, %arg5: memref<128x128xf32, #tpu.memory_space<vmem>>, %arg6: memref<128x128xf32, #tpu.memory_space<vmem>>, %arg7: memref<32x128xf32, #tpu.memory_space<vmem>>) attributes {dimension_semantics = [], scalar_prefetch = 0 : i64, scratch_operands = 0 : i64, tpu.core_type = #tpu.core_type<tc>} {
    %c0 = arith.constant 0 : index
    %c0_0 = arith.constant 0 : index
    %0 = vector.load %arg0[%c0, %c0_0] : memref<32x32xf32, #tpu.memory_space<vmem>>, vector<32x32xf32>
    %1 = tpu.concatenate %0, %0, %0, %0 in 0 : vector<32x32xf32>, vector<32x32xf32>, vector<32x32xf32>, vector<32x32xf32> -> vector<128x32xf32>
    %c0_1 = arith.constant 0 : index
    %c0_2 = arith.constant 0 : index
    %2 = vector.load %arg1[%c0_1, %c0_2] : memref<32x128xf32, #tpu.memory_space<vmem>>, vector<32x128xf32>
    %cst = arith.constant dense<0.000000e+00> : vector<128x128xf32>
    %3 = tpu.matmul %1, %2, %cst {dimension_numbers = #tpu.dot_dimension_numbers<[1], [0], [0], [1], [0, 0, 1, 1], [], []>} : vector<128x32xf32>, vector<32x128xf32>, vector<128x128xf32> -> vector<128x128xf32>
    %c0_3 = arith.constant 0 : index
    %c0_4 = arith.constant 0 : index
    %4 = vector.load %arg5[%c0_3, %c0_4] : memref<128x128xf32, #tpu.memory_space<vmem>>, vector<128x128xf32>
    %5 = arith.mulf %3, %4 : vector<128x128xf32>
    %c0_5 = arith.constant 0 : index
    %c0_6 = arith.constant 0 : index
    %6 = vector.load %arg3[%c0_5, %c0_6] : memref<128x128xf32, #tpu.memory_space<vmem>>, vector<128x128xf32>
    %cst_7 = arith.constant dense<0.000000e+00> : vector<128x128xf32>
    %7 = tpu.matmul %5, %6, %cst_7 {dimension_numbers = #tpu.dot_dimension_numbers<[1], [0], [0], [1], [0, 0, 1, 1], [], []>} : vector<128x128xf32>, vector<128x128xf32>, vector<128x128xf32> -> vector<128x128xf32>
    %c0_8 = arith.constant 0 : index
    %c0_9 = arith.constant 0 : index
    %8 = vector.load %arg2[%c0_8, %c0_9] : memref<128x128xf32, #tpu.memory_space<vmem>>, vector<128x128xf32>
    %cst_10 = arith.constant dense<0.000000e+00> : vector<128x128xf32>
    %9 = tpu.matmul %5, %8, %cst_10 {dimension_numbers = #tpu.dot_dimension_numbers<[1], [0], [0], [1], [0, 0, 1, 1], [], []>} : vector<128x128xf32>, vector<128x128xf32>, vector<128x128xf32> -> vector<128x128xf32>
    %cst_11 = arith.constant dense<0.000000e+00> : vector<128x128xf32>
    %10 = tpu.matmul %9, %5, %cst_11 {dimension_numbers = #tpu.dot_dimension_numbers<[1], [1], [0], [0], [0, 0, 1, 0], [], []>} : vector<128x128xf32>, vector<128x128xf32>, vector<128x128xf32> -> vector<128x128xf32>
    %c0_12 = arith.constant 0 : index
    %c0_13 = arith.constant 0 : index
    %11 = vector.load %arg6[%c0_12, %c0_13] : memref<128x128xf32, #tpu.memory_space<vmem>>, vector<128x128xf32>
    %12 = arith.addf %10, %11 : vector<128x128xf32>
    %cst_14 = arith.constant dense<0xFF800000> : vector<128xf32>
    %13 = vector.multi_reduction <maximumf>, %12, %cst_14 [1] : vector<128x128xf32> to vector<128xf32>
    %14 = vector.shape_cast %13 : vector<128xf32> to vector<128x1xf32>
    %15 = vector.broadcast %14 : vector<128x1xf32> to vector<128x128xf32>
    %16 = arith.subf %12, %15 : vector<128x128xf32>
    %17 = math.exp %16 : vector<128x128xf32>
    %cst_15 = arith.constant dense<0.000000e+00> : vector<128xf32>
    %18 = vector.multi_reduction <add>, %17, %cst_15 [1] : vector<128x128xf32> to vector<128xf32>
    %19 = vector.shape_cast %18 : vector<128xf32> to vector<128x1xf32>
    %20 = vector.broadcast %19 : vector<128x1xf32> to vector<128x128xf32>
    %21 = arith.divf %17, %20 : vector<128x128xf32>
    %cst_16 = arith.constant dense<0.000000e+00> : vector<128x128xf32>
    %22 = tpu.matmul %21, %7, %cst_16 {dimension_numbers = #tpu.dot_dimension_numbers<[1], [0], [0], [1], [0, 0, 1, 1], [], []>} : vector<128x128xf32>, vector<128x128xf32>, vector<128x128xf32> -> vector<128x128xf32>
    %23 = vector.extract_strided_slice %22 {offsets = [0, 0], sizes = [32, 128], strides = [1, 1]} : vector<128x128xf32> to vector<32x128xf32>
    %c0_17 = arith.constant 0 : index
    %c0_18 = arith.constant 0 : index
    %24 = vector.load %arg4[%c0_17, %c0_18] : memref<1x128xf32, #tpu.memory_space<vmem>>, vector<1x128xf32>
    %25 = vector.broadcast %24 : vector<1x128xf32> to vector<32x128xf32>
    %26 = arith.addf %23, %25 : vector<32x128xf32>
    %27 = vector.extract_strided_slice %22 {offsets = [32, 0], sizes = [32, 128], strides = [1, 1]} : vector<128x128xf32> to vector<32x128xf32>
    %28 = arith.addf %26, %27 : vector<32x128xf32>
    %29 = vector.extract_strided_slice %22 {offsets = [64, 0], sizes = [32, 128], strides = [1, 1]} : vector<128x128xf32> to vector<32x128xf32>
    %30 = arith.addf %28, %29 : vector<32x128xf32>
    %31 = vector.extract_strided_slice %22 {offsets = [96, 0], sizes = [32, 128], strides = [1, 1]} : vector<128x128xf32> to vector<32x128xf32>
    %32 = arith.addf %30, %31 : vector<32x128xf32>
    %c0_19 = arith.constant 0 : index
    %c0_20 = arith.constant 0 : index
    %33 = vector.load %arg7[%c0_19, %c0_20] : memref<32x128xf32, #tpu.memory_space<vmem>>, vector<32x128xf32>
    tpu.vector_store %arg7[%c0_19, %c0_20], %32 {strides = array<i32>} : memref<32x128xf32, #tpu.memory_space<vmem>>, vector<32x128xf32>,
    return
  }
}

</mosaic_0001>

<llo_original>
// kernel: attention_pallas.1
$region0: #{attention_pallas.1}
  #allocation0 [shape = 'u32[]', space=smem, size = 0x4, offset = 0x4, fixed_abs, tag = 'smem constant byte address 0x4 - core index']
  #allocation1 [shape = 'u32[144,128]{1,0:T(1,128)}', space=vmem, size = 0x12000, scoped, tag = 'internal scratch']
  %s0 = inlined_call_operand.hbm [shape: f32[32,32], index: 0, kind: input, shape index: {}]
  %s1 = inlined_call_operand.hbm [shape: f32[32,128], index: 1, kind: input, shape index: {}]
  %s2 = inlined_call_operand.hbm [shape: f32[128,128], index: 2, kind: input, shape index: {}]
  %s3 = inlined_call_operand.hbm [shape: f32[128,128], index: 3, kind: input, shape index: {}]
  %s4 = inlined_call_operand.vmem [shape: f32[1,128], index: 4, kind: input, shape index: {}]
  %s5 = inlined_call_operand.hbm [shape: f32[128,128], index: 5, kind: input, shape index: {}]
  %s6 = inlined_call_operand.hbm [shape: f32[128,128], index: 6, kind: input, shape index: {}]
  %s7 = inlined_call_operand.hbm [shape: f32[32,128], index: 7, kind: output, shape index: {}]
  %s8 = sld [smem:[#allocation0]]
  $region62: #{attention_pallas.1} parent=0
    _
  %s10 = ssub.s32 1, %s8
  %s11 = scalar_select 0, %s10, %s8
  $region1: #{attention_pallas.1} parent=0
    #allocation2 [shape = 'u8[16384]{0}', space=vmem, size = 0x4000, scoped, tag = 'input window, operand 0, single buffered']
    #allocation3 [shape = 's32[1]{0}', space=sflag, size = 0x4, scoped, tag = 'scoped memory for attention_pallas.1']
    #allocation4 [shape = 's32[1]{0}', space=sflag, size = 0x4, scoped, tag = 'scoped memory for attention_pallas.1']
    #allocation5 [shape = 'u8[16384]{0}', space=vmem, size = 0x4000, scoped, tag = 'input window, operand 1, single buffered']
    #allocation6 [shape = 's32[1]{0}', space=sflag, size = 0x4, scoped, tag = 'scoped memory for attention_pallas.1']
    #allocation7 [shape = 'u8[65536]{0}', space=vmem, size = 0x10000, scoped, tag = 'input window, operand 2, single buffered']
    #allocation8 [shape = 'u8[65536]{0}', space=vmem, size = 0x10000, scoped, tag = 'input window, operand 3, single buffered']
    #allocation9 [shape = 's32[1]{0}', space=sflag, size = 0x4, scoped, tag = 'scoped memory for attention_pallas.1']
    #allocation10 [shape = 'u8[65536]{0}', space=vmem, size = 0x10000, scoped, tag = 'input window, operand 5, single buffered']
    #allocation11 [shape = 'u8[65536]{0}', space=vmem, size = 0x10000, scoped, tag = 'input window, operand 6, single buffered']
    #allocation12 [shape = 's32[1]{0}', space=sflag, size = 0x4, scoped, tag = 'scoped memory for attention_pallas.1']
    #allocation13 [shape = 'u8[16384]{0}', space=vmem, size = 0x4000, scoped, tag = 'output window, operand 0, single buffered']
    %12 = vsyncpa [#allocation3], 0
    %13 = vsyncpa [#allocation6], 0
    %14 = vsyncpa [#allocation9], 0
    %15 = vsyncpa [#allocation12], 0
    %16 = vsyncpa [#allocation4], 0
    // Predicated region
    $region2: #{attention_pallas.1} parent=1 // pred_check
      _
    $region3: #{attention_pallas.1} parent=1 // pred_check_branch
      %18 = sbr.rel (0) target = $region5
    $region4: #{attention_pallas.1} parent=1 // pred_region
      %s20 = ssub.s32 512, 512
      %21 = vsyncadd [#allocation3], %s20
      %s22 = sshll.u32 [#allocation2], 4
      %s23 = int_to_ptr.vmem [resolvable:$true] %s22
      %28 = dma.hbm_to_vmem [thread:$0]  %s0, 512, %s23, [#allocation3], 128, 128, 8
    $region5: #{attention_pallas.1} parent=1 // pred_fallthru
      _
    // Predicated region
    $region6: #{attention_pallas.1} parent=1 // pred_check
      _
    $region7: #{attention_pallas.1} parent=1 // pred_check_branch
      %30 = sbr.rel (0) target = $region9
    $region8: #{attention_pallas.1} parent=1 // pred_region
      %s32 = ssub.s32 512, 512
      %33 = vsyncadd [#allocation6], %s32
      %s34 = sshll.u32 [#allocation5], 4
      %s35 = int_to_ptr.vmem [resolvable:$true] %s34
      %40 = dma.hbm_to_vmem [thread:$0]  %s1, 512, %s35, [#allocation6], 128, 128, 8
    $region9: #{attention_pallas.1} parent=1 // pred_fallthru
      _
    // Predicated region
    $region10: #{attention_pallas.1} parent=1 // pred_check
      _
    $region11: #{attention_pallas.1} parent=1 // pred_check_branch
      %42 = sbr.rel (0) target = $region13
    $region12: #{attention_pallas.1} parent=1 // pred_region
      %s44 = ssub.s32 2048, 2048
      %45 = vsyncadd [#allocation6], %s44
      %s46 = sshll.u32 [#allocation7], 4
      %s47 = int_to_ptr.vmem [resolvable:$true] %s46
      %52 = dma.hbm_to_vmem [thread:$0]  %s2, 2048, %s47, [#allocation6], 128, 128, 8
    $region13: #{attention_pallas.1} parent=1 // pred_fallthru
      _
    // Predicated region
    $region14: #{attention_pallas.1} parent=1 // pred_check
      _
    $region15: #{attention_pallas.1} parent=1 // pred_check_branch
      %54 = sbr.rel (0) target = $region17
    $region16: #{attention_pallas.1} parent=1 // pred_region
      %s56 = ssub.s32 2048, 2048
      %57 = vsyncadd [#allocation9], %s56
      %s58 = sshll.u32 [#allocation8], 4
      %s59 = int_to_ptr.vmem [resolvable:$true] %s58
      %64 = dma.hbm_to_vmem [thread:$0]  %s3, 2048, %s59, [#allocation9], 128, 128, 8
    $region17: #{attention_pallas.1} parent=1 // pred_fallthru
      _
    // Predicated region
    $region18: #{attention_pallas.1} parent=1 // pred_check
      _
    $region19: #{attention_pallas.1} parent=1 // pred_check_branch
      %66 = sbr.rel (0) target = $region21
    $region20: #{attention_pallas.1} parent=1 // pred_region
      _
    $region21: #{attention_pallas.1} parent=1 // pred_fallthru
      _
    // Predicated region
    $region22: #{attention_pallas.1} parent=1 // pred_check
      _
    $region23: #{attention_pallas.1} parent=1 // pred_check_branch
      %68 = sbr.rel (0) target = $region25
    $region24: #{attention_pallas.1} parent=1 // pred_region
      %s70 = ssub.s32 2048, 2048
      %71 = vsyncadd [#allocation9], %s70
      %s72 = sshll.u32 [#allocation10], 4
      %s73 = int_to_ptr.vmem [resolvable:$true] %s72
      %78 = dma.hbm_to_vmem [thread:$0]  %s5, 2048, %s73, [#allocation9], 128, 128, 8
    $region25: #{attention_pallas.1} parent=1 // pred_fallthru
      _
    // Predicated region
    $region26: #{attention_pallas.1} parent=1 // pred_check
      _
    $region27: #{attention_pallas.1} parent=1 // pred_check_branch
      %80 = sbr.rel (0) target = $region29
    $region28: #{attention_pallas.1} parent=1 // pred_region
      %s82 = ssub.s32 2048, 2048
      %83 = vsyncadd [#allocation12], %s82
      %s84 = sshll.u32 [#allocation11], 4
      %s85 = int_to_ptr.vmem [resolvable:$true] %s84
      %90 = dma.hbm_to_vmem [thread:$0]  %s6, 2048, %s85, [#allocation12], 128, 128, 8
    $region29: #{attention_pallas.1} parent=1 // pred_fallthru
      _
    // Predicated region
    $region30: #{attention_pallas.1} parent=1 // pred_check
      _
    $region31: #{attention_pallas.1} parent=1 // pred_check_branch
      %92 = sbr.rel (0) target = $region33
    $region32: #{attention_pallas.1} parent=1 // pred_region
      %93 = dma.done [#allocation3], 512
    $region33: #{attention_pallas.1} parent=1 // pred_fallthru
      _
    // Predicated region
    $region34: #{attention_pallas.1} parent=1 // pred_check
      _
    $region35: #{attention_pallas.1} parent=1 // pred_check_branch
      %95 = sbr.rel (0) target = $region37
    $region36: #{attention_pallas.1} parent=1 // pred_region
      %96 = dma.done [#allocation6], 512
    $region37: #{attention_pallas.1} parent=1 // pred_fallthru
      _
    // Predicated region
    $region38: #{attention_pallas.1} parent=1 // pred_check
      _
    $region39: #{attention_pallas.1} parent=1 // pred_check_branch
      %98 = sbr.rel (0) target = $region41
    $region40: #{attention_pallas.1} parent=1 // pred_region
      %99 = dma.done [#allocation6], 2048
    $region41: #{attention_pallas.1} parent=1 // pred_fallthru
      _
    // Predicated region
    $region42: #{attention_pallas.1} parent=1 // pred_check
      _
    $region43: #{attention_pallas.1} parent=1 // pred_check_branch
      %101 = sbr.rel (0) target = $region45
    $region44: #{attention_pallas.1} parent=1 // pred_region
      %102 = dma.done [#allocation9], 2048
    $region45: #{attention_pallas.1} parent=1 // pred_fallthru
      _
    // Predicated region
    $region46: #{attention_pallas.1} parent=1 // pred_check
      _
    $region47: #{attention_pallas.1} parent=1 // pred_check_branch
      %104 = sbr.rel (0) target = $region49
    $region48: #{attention_pallas.1} parent=1 // pred_region
      %105 = dma.done [#allocation9], 2048
    $region49: #{attention_pallas.1} parent=1 // pred_fallthru
      _
    // Predicated region
    $region50: #{attention_pallas.1} parent=1 // pred_check
      _
    $region51: #{attention_pallas.1} parent=1 // pred_check_branch
      %107 = sbr.rel (0) target = $region53
    $region52: #{attention_pallas.1} parent=1 // pred_region
      %108 = dma.done [#allocation12], 2048
    $region53: #{attention_pallas.1} parent=1 // pred_fallthru
      _
    %v109 = vld [vmem:[#allocation2] sm:$0xff]
    %v110 = vld [vmem:[#allocation2 + $0x8] sm:$0xff]
    %v111 = vld [vmem:[#allocation2 + $0x10] sm:$0xff]
    %v112 = vld [vmem:[#allocation2 + $0x18] sm:$0xff]
    %v113 = vld [vmem:[#allocation5] sm:$0xff]
    %v114 = vld [vmem:[#allocation5 + $0x8] sm:$0xff]
    %v115 = vld [vmem:[#allocation5 + $0x10] sm:$0xff]
    %v116 = vld [vmem:[#allocation5 + $0x18] sm:$0xff]
    %vm117 = vcmask 261120
    %v119 = vsel %vm117, %v109, 0
    %v122 = vsel %vm117, %v110, 0
    %v125 = vsel %vm117, %v111, 0
    %v128 = vsel %vm117, %v112, 0
    %130 = vmatprep.subr.mxu0 0.0
    %131 = vmatpush1.msra.mxu0 %v113
    %132 = vmatprep.subr.mxu0 0.0
    %133 = vmatpush1.msra.mxu0 %v114
    %134 = vmatprep.subr.mxu0 0.0
    %135 = vmatpush1.msra.mxu0 %v115
    %136 = vmatprep.subr.mxu0 0.0
    %137 = vmatpush1.msra.mxu0 %v116
    %138 = vmatprep.subr.mxu0 0.0
    %139 = vmatpush1.msra.mxu0 0.0
    %140 = vmatprep.subr.mxu0 0.0
    %141 = vmatpush1.msra.mxu0 0.0
    %142 = vmatprep.subr.mxu0 0.0
    %143 = vmatpush1.msra.mxu0 0.0
    %144 = vmatprep.subr.mxu0 0.0
    %145 = vmatpush1.msra.mxu0 0.0
    %146 = vmatprep.subr.mxu0 0.0
    %147 = vmatpush1.msra.mxu0 0.0
    %148 = vmatprep.subr.mxu0 0.0
    %149 = vmatpush1.msra.mxu0 0.0
    %150 = vmatprep.subr.mxu0 0.0
    %151 = vmatpush1.msra.mxu0 0.0
    %152 = vmatprep.subr.mxu0 0.0
    %153 = vmatpush1.msra.mxu0 0.0
    %154 = vmatprep.subr.mxu0 0.0
    %155 = vmatpush1.msra.mxu0 0.0
    %156 = vmatprep.subr.mxu0 0.0
    %157 = vmatpush1.msra.mxu0 0.0
    %158 = vmatprep.subr.mxu0 0.0
    %159 = vmatpush1.msra.mxu0 0.0
    %160 = vmatprep.subr.mxu0 0.0
    %161 = vmatpush1.msra.mxu0 0.0
    %162 = vmatprep.subr.mxu0 0.0
    %163 = vmatpush1.msra.mxu0 0.0
    %164 = vmatprep.subr.mxu0 0.0
    %165 = vmatpush1.msra.mxu0 0.0
    %166 = vmatprep.subr.mxu0 0.0
    %167 = vmatpush1.msra.mxu0 0.0
    %168 = vmatprep.subr.mxu0 0.0
    %169 = vmatpush1.msra.mxu0 0.0
    %170 = vmatprep.subr.mxu0 0.0
    %171 = vmatpush1.msra.mxu0 0.0
    %172 = vmatprep.subr.mxu0 0.0
    %173 = vmatpush1.msra.mxu0 0.0
    %174 = vmatprep.subr.mxu0 0.0
    %175 = vmatpush1.msra.mxu0 0.0
    %176 = vmatprep.subr.mxu0 0.0
    %177 = vmatpush1.msra.mxu0 0.0
    %178 = vmatprep.subr.mxu0 0.0
    %179 = vmatpush1.msra.mxu0 0.0
    %180 = vmatprep.subr.mxu0 0.0
    %181 = vmatpush1.msra.mxu0 0.0
    %182 = vmatprep.subr.mxu0 0.0
    %183 = vmatpush1.msra.mxu0 0.0
    %184 = vmatprep.subr.mxu0 0.0
    %185 = vmatpush1.msra.mxu0 0.0
    %186 = vmatprep.subr.mxu0 0.0
    %187 = vmatpush1.msra.mxu0 0.0
    %188 = vmatprep.subr.mxu0 0.0
    %189 = vmatpush1.msra.mxu0 0.0
    %190 = vmatprep.subr.mxu0 0.0
    %191 = vmatpush1.msra.mxu0 0.0
    %192 = vmatprep.subr.mxu0 0.0
    %193 = vmatpush1.msra.mxu0 0.0
    %194 = vmatprep.mubr.f32.mxu0 0.0
    %195 = vmatmul.mubr.f32.gmra.mrb[0].mxu0 %v119
    %v196 = vpop.f32.mrb[0].mxu0
    %v197 = vadd.f32 0.0, %v196
    %v198 = vpop.f32.mrb[0].mxu0
    %199 = vmatprep.mubr.f32.mxu0 0.0
    %200 = vmatmul.mubr.f32.gmra.mrb[0].mxu0 %v122
    %v201 = vpop.f32.mrb[0].mxu0
    %v202 = vadd.f32 0.0, %v201
    %v203 = vpop.f32.mrb[0].mxu0
    %204 = vmatprep.mubr.f32.mxu0 0.0
    %205 = vmatmul.mubr.f32.gmra.mrb[0].mxu0 %v125
    %v206 = vpop.f32.mrb[0].mxu0
    %v207 = vadd.f32 0.0, %v206
    %v208 = vpop.f32.mrb[0].mxu0
    %209 = vmatprep.mubr.f32.mxu0 0.0
    %210 = vmatmul.mubr.f32.gmra.mrb[0].mxu0 %v128
    %v211 = vpop.f32.mrb[0].mxu0
    %v212 = vadd.f32 0.0, %v211
    %v213 = vpop.f32.mrb[0].mxu0
    %214 = vmatprep.mubr.f32.mxu0 0.0
    %215 = vmatmul.mubr.f32.gmra.mrb[0].mxu0 %v119
    %v216 = vpop.f32.mrb[0].mxu0
    %v217 = vadd.f32 0.0, %v216
    %v218 = vpop.f32.mrb[0].mxu0
    %219 = vmatprep.mubr.f32.mxu0 0.0
    %220 = vmatmul.mubr.f32.gmra.mrb[0].mxu0 %v122
    %v221 = vpop.f32.mrb[0].mxu0
    %v222 = vadd.f32 0.0, %v221
    %v223 = vpop.f32.mrb[0].mxu0
    %224 = vmatprep.mubr.f32.mxu0 0.0
    %225 = vmatmul.mubr.f32.gmra.mrb[0].mxu0 %v125
    %v226 = vpop.f32.mrb[0].mxu0
    %v227 = vadd.f32 0.0, %v226
    %v228 = vpop.f32.mrb[0].mxu0
    %229 = vmatprep.mubr.f32.mxu0 0.0
    %230 = vmatmul.mubr.f32.gmra.mrb[0].mxu0 %v128
    %v231 = vpop.f32.mrb[0].mxu0
    %v232 = vadd.f32 0.0, %v231
    %v233 = vpop.f32.mrb[0].mxu0
    %234 = vmatprep.mubr.f32.mxu0 0.0
    %235 = vmatmul.mubr.f32.gmra.mrb[0].mxu0 %v119
    %v236 = vpop.f32.mrb[0].mxu0
    %v237 = vadd.f32 0.0, %v236
    %v238 = vpop.f32.mrb[0].mxu0
    %239 = vmatprep.mubr.f32.mxu0 0.0
    %240 = vmatmul.mubr.f32.gmra.mrb[0].mxu0 %v122
    %v241 = vpop.f32.mrb[0].mxu0
    %v242 = vadd.f32 0.0, %v241
    %v243 = vpop.f32.mrb[0].mxu0
    %244 = vmatprep.mubr.f32.mxu0 0.0
    %245 = vmatmul.mubr.f32.gmra.mrb[0].mxu0 %v125
    %v246 = vpop.f32.mrb[0].mxu0
    %v247 = vadd.f32 0.0, %v246
    %v248 = vpop.f32.mrb[0].mxu0
    %249 = vmatprep.mubr.f32.mxu0 0.0
    %250 = vmatmul.mubr.f32.gmra.mrb[0].mxu0 %v128
    %v251 = vpop.f32.mrb[0].mxu0
    %v252 = vadd.f32 0.0, %v251
    %v253 = vpop.f32.mrb[0].mxu0
    %254 = vmatprep.mubr.f32.mxu0 0.0
    %255 = vmatmul.mubr.f32.gmra.mrb[0].mxu0 %v119
    %v256 = vpop.f32.mrb[0].mxu0
    %v257 = vadd.f32 0.0, %v256
    %v258 = vpop.f32.mrb[0].mxu0
    %259 = vmatprep.mubr.f32.mxu0 0.0
    %260 = vmatmul.mubr.f32.gmra.mrb[0].mxu0 %v122
    %v261 = vpop.f32.mrb[0].mxu0
    %v262 = vadd.f32 0.0, %v261
    %v263 = vpop.f32.mrb[0].mxu0
    %264 = vmatprep.mubr.f32.mxu0 0.0
    %265 = vmatmul.mubr.f32.gmra.mrb[0].mxu0 %v125
    %v266 = vpop.f32.mrb[0].mxu0
    %v267 = vadd.f32 0.0, %v266
    %v268 = vpop.f32.mrb[0].mxu0
    %269 = vmatprep.mubr.f32.mxu0 0.0
    %270 = vmatmul.mubr.f32.gmra.mrb[0].mxu0 %v128
    %v271 = vpop.f32.mrb[0].mxu0
    %v272 = vadd.f32 0.0, %v271
    %v273 = vpop.f32.mrb[0].mxu0
    %274 = vdwg.mxu0
    %v275 = vld [vmem:[#allocation10] sm:$0xff]
    %v276 = vld [vmem:[#allocation10 + $0x8] sm:$0xff]
    %v277 = vld [vmem:[#allocation10 + $0x10] sm:$0xff]
    %v278 = vld [vmem:[#allocation10 + $0x18] sm:$0xff]
    %v279 = vld [vmem:[#allocation10 + $0x20] sm:$0xff]
    %v280 = vld [vmem:[#allocation10 + $0x28] sm:$0xff]
    %v281 = vld [vmem:[#allocation10 + $0x30] sm:$0xff]
    %v282 = vld [vmem:[#allocation10 + $0x38] sm:$0xff]
    %v283 = vld [vmem:[#allocation10 + $0x40] sm:$0xff]
    %v284 = vld [vmem:[#allocation10 + $0x48] sm:$0xff]
    %v285 = vld [vmem:[#allocation10 + $0x50] sm:$0xff]
    %v286 = vld [vmem:[#allocation10 + $0x58] sm:$0xff]
    %v287 = vld [vmem:[#allocation10 + $0x60] sm:$0xff]
    %v288 = vld [vmem:[#allocation10 + $0x68] sm:$0xff]
    %v289 = vld [vmem:[#allocation10 + $0x70] sm:$0xff]
    %v290 = vld [vmem:[#allocation10 + $0x78] sm:$0xff]
    %v291 = vmul.f32 %v197, %v275
    %v292 = vmul.f32 %v202, %v276
    %v293 = vmul.f32 %v207, %v277
    %v294 = vmul.f32 %v212, %v278
    %v295 = vmul.f32 %v217, %v279
    %v296 = vmul.f32 %v222, %v280
    %v297 = vmul.f32 %v227, %v281
    %v298 = vmul.f32 %v232, %v282
    %v299 = vmul.f32 %v237, %v283
    %v300 = vmul.f32 %v242, %v284
    %v301 = vmul.f32 %v247, %v285
    %v302 = vmul.f32 %v252, %v286
    %v303 = vmul.f32 %v257, %v287
    %v304 = vmul.f32 %v262, %v288
    %v305 = vmul.f32 %v267, %v289
    %v306 = vmul.f32 %v272, %v290
    %v307 = vld [vmem:[#allocation8] sm:$0xff]
    %v308 = vld [vmem:[#allocation8 + $0x8] sm:$0xff]
    %v309 = vld [vmem:[#allocation8 + $0x10] sm:$0xff]
    %v310 = vld [vmem:[#allocation8 + $0x18] sm:$0xff]
    %v311 = vld [vmem:[#allocation8 + $0x20] sm:$0xff]
    %v312 = vld [vmem:[#allocation8 + $0x28] sm:$0xff]
    %v313 = vld [vmem:[#allocation8 + $0x30] sm:$0xff]
    %v314 = vld [vmem:[#allocation8 + $0x38] sm:$0xff]
    %v315 = vld [vmem:[#allocation8 + $0x40] sm:$0xff]
    %v316 = vld [vmem:[#allocation8 + $0x48] sm:$0xff]
    %v317 = vld [vmem:[#allocation8 + $0x50] sm:$0xff]
    %v318 = vld [vmem:[#allocation8 + $0x58] sm:$0xff]
    %v319 = vld [vmem:[#allocation8 + $0x60] sm:$0xff]
    %v320 = vld [vmem:[#allocation8 + $0x68] sm:$0xff]
    %v321 = vld [vmem:[#allocation8 + $0x70] sm:$0xff]
    %v322 = vld [vmem:[#allocation8 + $0x78] sm:$0xff]
    %323 = vmatprep.subr.mxu0 0.0
    %324 = vmatpush1.msra.mxu0 %v307
    %325 = vmatprep.subr.mxu0 0.0
    %326 = vmatpush1.msra.mxu0 %v308
    %327 = vmatprep.subr.mxu0 0.0
    %328 = vmatpush1.msra.mxu0 %v309
    %329 = vmatprep.subr.mxu0 0.0
    %330 = vmatpush1.msra.mxu0 %v310
    %331 = vmatprep.subr.mxu0 0.0
    %332 = vmatpush1.msra.mxu0 %v311
    %333 = vmatprep.subr.mxu0 0.0
    %334 = vmatpush1.msra.mxu0 %v312
    %335 = vmatprep.subr.mxu0 0.0
    %336 = vmatpush1.msra.mxu0 %v313
    %337 = vmatprep.subr.mxu0 0.0
    %338 = vmatpush1.msra.mxu0 %v314
    %339 = vmatprep.subr.mxu0 0.0
    %340 = vmatpush1.msra.mxu0 %v315
    %341 = vmatprep.subr.mxu0 0.0
    %342 = vmatpush1.msra.mxu0 %v316
    %343 = vmatprep.subr.mxu0 0.0
    %344 = vmatpush1.msra.mxu0 %v317
    %345 = vmatprep.subr.mxu0 0.0
    %346 = vmatpush1.msra.mxu0 %v318
    %347 = vmatprep.subr.mxu0 0.0
    %348 = vmatpush1.msra.mxu0 %v319
    %349 = vmatprep.subr.mxu0 0.0
    %350 = vmatpush1.msra.mxu0 %v320
    %351 = vmatprep.subr.mxu0 0.0
    %352 = vmatpush1.msra.mxu0 %v321
    %353 = vmatprep.subr.mxu0 0.0
    %354 = vmatpush1.msra.mxu0 %v322
    %355 = vmatprep.subr.mxu0 0.0
    %356 = vmatpush1.msra.mxu0 0.0
    %357 = vmatprep.subr.mxu0 0.0
    %358 = vmatpush1.msra.mxu0 0.0
    %359 = vmatprep.subr.mxu0 0.0
    %360 = vmatpush1.msra.mxu0 0.0
    %361 = vmatprep.subr.mxu0 0.0
    %362 = vmatpush1.msra.mxu0 0.0
    %363 = vmatprep.subr.mxu0 0.0
    %364 = vmatpush1.msra.mxu0 0.0
    %365 = vmatprep.subr.mxu0 0.0
    %366 = vmatpush1.msra.mxu0 0.0
    %367 = vmatprep.subr.mxu0 0.0
    %368 = vmatpush1.msra.mxu0 0.0
    %369 = vmatprep.subr.mxu0 0.0
    %370 = vmatpush1.msra.mxu0 0.0
    %371 = vmatprep.subr.mxu0 0.0
    %372 = vmatpush1.msra.mxu0 0.0
    %373 = vmatprep.subr.mxu0 0.0
    %374 = vmatpush1.msra.mxu0 0.0
    %375 = vmatprep.subr.mxu0 0.0
    %376 = vmatpush1.msra.mxu0 0.0
    %377 = vmatprep.subr.mxu0 0.0
    %378 = vmatpush1.msra.mxu0 0.0
    %379 = vmatprep.subr.mxu0 0.0
    %380 = vmatpush1.msra.mxu0 0.0
    %381 = vmatprep.subr.mxu0 0.0
    %382 = vmatpush1.msra.mxu0 0.0
    %383 = vmatprep.subr.mxu0 0.0
    %384 = vmatpush1.msra.mxu0 0.0
    %385 = vmatprep.subr.mxu0 0.0
    %386 = vmatpush1.msra.mxu0 0.0
    %387 = vmatprep.mubr.f32.mxu0 0.0
    %388 = vmatmul.mubr.f32.gmra.mrb[0].mxu0 %v291
    %v389 = vpop.f32.mrb[0].mxu0
    %v390 = vadd.f32 0.0, %v389
    %v391 = vpop.f32.mrb[0].mxu0
    %392 = vmatprep.mubr.f32.mxu0 0.0
    %393 = vmatmul.mubr.f32.gmra.mrb[0].mxu0 %v292
    %v394 = vpop.f32.mrb[0].mxu0
    %v395 = vadd.f32 0.0, %v394
    %v396 = vpop.f32.mrb[0].mxu0
    %397 = vmatprep.mubr.f32.mxu0 0.0
    %398 = vmatmul.mubr.f32.gmra.mrb[0].mxu0 %v293
    %v399 = vpop.f32.mrb[0].mxu0
    %v400 = vadd.f32 0.0, %v399
    %v401 = vpop.f32.mrb[0].mxu0
    %402 = vmatprep.mubr.f32.mxu0 0.0
    %403 = vmatmul.mubr.f32.gmra.mrb[0].mxu0 %v294
    %v404 = vpop.f32.mrb[0].mxu0
    %v405 = vadd.f32 0.0, %v404
    %v406 = vpop.f32.mrb[0].mxu0
    %407 = vmatprep.mubr.f32.mxu0 0.0
    %408 = vmatmul.mubr.f32.gmra.mrb[0].mxu0 %v295
    %v409 = vpop.f32.mrb[0].mxu0
    %v410 = vadd.f32 0.0, %v409
    %v411 = vpop.f32.mrb[0].mxu0
    %412 = vmatprep.mubr.f32.mxu0 0.0
    %413 = vmatmul.mubr.f32.gmra.mrb[0].mxu0 %v296
    %v414 = vpop.f32.mrb[0].mxu0
    %v415 = vadd.f32 0.0, %v414
    %v416 = vpop.f32.mrb[0].mxu0
    %417 = vmatprep.mubr.f32.mxu0 0.0
    %418 = vmatmul.mubr.f32.gmra.mrb[0].mxu0 %v297
    %v419 = vpop.f32.mrb[0].mxu0
    %v420 = vadd.f32 0.0, %v419
    %v421 = vpop.f32.mrb[0].mxu0
    %422 = vmatprep.mubr.f32.mxu0 0.0
    %423 = vmatmul.mubr.f32.gmra.mrb[0].mxu0 %v298
    %v424 = vpop.f32.mrb[0].mxu0
    %v425 = vadd.f32 0.0, %v424
    %v426 = vpop.f32.mrb[0].mxu0
    %427 = vmatprep.mubr.f32.mxu0 0.0
    %428 = vmatmul.mubr.f32.gmra.mrb[0].mxu0 %v299
    %v429 = vpop.f32.mrb[0].mxu0
    %v430 = vadd.f32 0.0, %v429
    %v431 = vpop.f32.mrb[0].mxu0
    %432 = vmatprep.mubr.f32.mxu0 0.0
    %433 = vmatmul.mubr.f32.gmra.mrb[0].mxu0 %v300
    %v434 = vpop.f32.mrb[0].mxu0
    %v435 = vadd.f32 0.0, %v434
    %v436 = vpop.f32.mrb[0].mxu0
    %437 = vmatprep.mubr.f32.mxu0 0.0
    %438 = vmatmul.mubr.f32.gmra.mrb[0].mxu0 %v301
    %v439 = vpop.f32.mrb[0].mxu0
    %v440 = vadd.f32 0.0, %v439
    %v441 = vpop.f32.mrb[0].mxu0
    %442 = vmatprep.mubr.f32.mxu0 0.0
    %443 = vmatmul.mubr.f32.gmra.mrb[0].mxu0 %v302
    %v444 = vpop.f32.mrb[0].mxu0
    %v445 = vadd.f32 0.0, %v444
    %v446 = vpop.f32.mrb[0].mxu0
    %447 = vmatprep.mubr.f32.mxu0 0.0
    %448 = vmatmul.mubr.f32.gmra.mrb[0].mxu0 %v303
    %v449 = vpop.f32.mrb[0].mxu0
    %v450 = vadd.f32 0.0, %v449
    %v451 = vpop.f32.mrb[0].mxu0
    %452 = vmatprep.mubr.f32.mxu0 0.0
    %453 = vmatmul.mubr.f32.gmra.mrb[0].mxu0 %v304
    %v454 = vpop.f32.mrb[0].mxu0
    %v455 = vadd.f32 0.0, %v454
    %v456 = vpop.f32.mrb[0].mxu0
    %457 = vmatprep.mubr.f32.mxu0 0.0
    %458 = vmatmul.mubr.f32.gmra.mrb[0].mxu0 %v305
    %v459 = vpop.f32.mrb[0].mxu0
    %v460 = vadd.f32 0.0, %v459
    %v461 = vpop.f32.mrb[0].mxu0
    %462 = vmatprep.mubr.f32.mxu0 0.0
    %463 = vmatmul.mubr.f32.gmra.mrb[0].mxu0 %v306
    %v464 = vpop.f32.mrb[0].mxu0
    %v465 = vadd.f32 0.0, %v464
    %v466 = vpop.f32.mrb[0].mxu0
    %467 = vdwg.mxu0
    %v468 = vld [vmem:[#allocation7] sm:$0xff]
    %v469 = vld [vmem:[#allocation7 + $0x8] sm:$0xff]
    %v470 = vld [vmem:[#allocation7 + $0x10] sm:$0xff]
    %v471 = vld [vmem:[#allocation7 + $0x18] sm:$0xff]
    %v472 = vld [vmem:[#allocation7 + $0x20] sm:$0xff]
    %v473 = vld [vmem:[#allocation7 + $0x28] sm:$0xff]
    %v474 = vld [vmem:[#allocation7 + $0x30] sm:$0xff]
    %v475 = vld [vmem:[#allocation7 + $0x38] sm:$0xff]
    %v476 = vld [vmem:[#allocation7 + $0x40] sm:$0xff]
    %v477 = vld [vmem:[#allocation7 + $0x48] sm:$0xff]
    %v478 = vld [vmem:[#allocation7 + $0x50] sm:$0xff]
    %v479 = vld [vmem:[#allocation7 + $0x58] sm:$0xff]
    %v480 = vld [vmem:[#allocation7 + $0x60] sm:$0xff]
    %v481 = vld [vmem:[#allocation7 + $0x68] sm:$0xff]
    %v482 = vld [vmem:[#allocation7 + $0x70] sm:$0xff]
    %v483 = vld [vmem:[#allocation7 + $0x78] sm:$0xff]
    %484 = vmatprep.subr.mxu0 0.0
    %485 = vmatpush1.msra.mxu0 %v468
    %486 = vmatprep.subr.mxu0 0.0
    %487 = vmatpush1.msra.mxu0 %v469
    %488 = vmatprep.subr.mxu0 0.0
    %489 = vmatpush1.msra.mxu0 %v470
    %490 = vmatprep.subr.mxu0 0.0
    %491 = vmatpush1.msra.mxu0 %v471
    %492 = vmatprep.subr.mxu0 0.0
    %493 = vmatpush1.msra.mxu0 %v472
    %494 = vmatprep.subr.mxu0 0.0
    %495 = vmatpush1.msra.mxu0 %v473
    %496 = vmatprep.subr.mxu0 0.0
    %497 = vmatpush1.msra.mxu0 %v474
    %498 = vmatprep.subr.mxu0 0.0
    %499 = vmatpush1.msra.mxu0 %v475
    %500 = vmatprep.subr.mxu0 0.0
    %501 = vmatpush1.msra.mxu0 %v476
    %502 = vmatprep.subr.mxu0 0.0
    %503 = vmatpush1.msra.mxu0 %v477
    %504 = vmatprep.subr.mxu0 0.0
    %505 = vmatpush1.msra.mxu0 %v478
    %506 = vmatprep.subr.mxu0 0.0
    %507 = vmatpush1.msra.mxu0 %v479
    %508 = vmatprep.subr.mxu0 0.0
    %509 = vmatpush1.msra.mxu0 %v480
    %510 = vmatprep.subr.mxu0 0.0
    %511 = vmatpush1.msra.mxu0 %v481
    %512 = vmatprep.subr.mxu0 0.0
    %513 = vmatpush1.msra.mxu0 %v482
    %514 = vmatprep.subr.mxu0 0.0
    %515 = vmatpush1.msra.mxu0 %v483
    %516 = vmatprep.subr.mxu0 0.0
    %517 = vmatpush1.msra.mxu0 0.0
    %518 = vmatprep.subr.mxu0 0.0
    %519 = vmatpush1.msra.mxu0 0.0
    %520 = vmatprep.subr.mxu0 0.0
    %521 = vmatpush1.msra.mxu0 0.0
    %522 = vmatprep.subr.mxu0 0.0
    %523 = vmatpush1.msra.mxu0 0.0
    %524 = vmatprep.subr.mxu0 0.0
    %525 = vmatpush1.msra.mxu0 0.0
    %526 = vmatprep.subr.mxu0 0.0
    %527 = vmatpush1.msra.mxu0 0.0
    %528 = vmatprep.subr.mxu0 0.0
    %529 = vmatpush1.msra.mxu0 0.0
    %530 = vmatprep.subr.mxu0 0.0
    %531 = vmatpush1.msra.mxu0 0.0
    %532 = vmatprep.subr.mxu0 0.0
    %533 = vmatpush1.msra.mxu0 0.0
    %534 = vmatprep.subr.mxu0 0.0
    %535 = vmatpush1.msra.mxu0 0.0
    %536 = vmatprep.subr.mxu0 0.0
    %537 = vmatpush1.msra.mxu0 0.0
    %538 = vmatprep.subr.mxu0 0.0
    %539 = vmatpush1.msra.mxu0 0.0
    %540 = vmatprep.subr.mxu0 0.0
    %541 = vmatpush1.msra.mxu0 0.0
    %542 = vmatprep.subr.mxu0 0.0
    %543 = vmatpush1.msra.mxu0 0.0
    %544 = vmatprep.subr.mxu0 0.0
    %545 = vmatpush1.msra.mxu0 0.0
    %546 = vmatprep.subr.mxu0 0.0
    %547 = vmatpush1.msra.mxu0 0.0
    %548 = vmatprep.mubr.f32.mxu0 0.0
    %549 = vmatmul.mubr.f32.gmra.mrb[0].mxu0 %v291
    %v550 = vpop.f32.mrb[0].mxu0
    %v551 = vadd.f32 0.0, %v550
    %v552 = vpop.f32.mrb[0].mxu0
    %553 = vmatprep.mubr.f32.mxu0 0.0
    %554 = vmatmul.mubr.f32.gmra.mrb[0].mxu0 %v292
    %v555 = vpop.f32.mrb[0].mxu0
    %v556 = vadd.f32 0.0, %v555
    %v557 = vpop.f32.mrb[0].mxu0
    %558 = vmatprep.mubr.f32.mxu0 0.0
    %559 = vmatmul.mubr.f32.gmra.mrb[0].mxu0 %v293
    %v560 = vpop.f32.mrb[0].mxu0
    %v561 = vadd.f32 0.0, %v560
    %v562 = vpop.f32.mrb[0].mxu0
    %563 = vmatprep.mubr.f32.mxu0 0.0
    %564 = vmatmul.mubr.f32.gmra.mrb[0].mxu0 %v294
    %v565 = vpop.f32.mrb[0].mxu0
    %v566 = vadd.f32 0.0, %v565
    %v567 = vpop.f32.mrb[0].mxu0
    %568 = vmatprep.mubr.f32.mxu0 0.0
    %569 = vmatmul.mubr.f32.gmra.mrb[0].mxu0 %v295
    %v570 = vpop.f32.mrb[0].mxu0
    %v571 = vadd.f32 0.0, %v570
    %v572 = vpop.f32.mrb[0].mxu0
    %573 = vmatprep.mubr.f32.mxu0 0.0
    %574 = vmatmul.mubr.f32.gmra.mrb[0].mxu0 %v296
    %v575 = vpop.f32.mrb[0].mxu0
    %v576 = vadd.f32 0.0, %v575
    %v577 = vpop.f32.mrb[0].mxu0
    %578 = vmatprep.mubr.f32.mxu0 0.0
    %579 = vmatmul.mubr.f32.gmra.mrb[0].mxu0 %v297
    %v580 = vpop.f32.mrb[0].mxu0
    %v581 = vadd.f32 0.0, %v580
    %v582 = vpop.f32.mrb[0].mxu0
    %583 = vmatprep.mubr.f32.mxu0 0.0
    %584 = vmatmul.mubr.f32.gmra.mrb[0].mxu0 %v298
    %v585 = vpop.f32.mrb[0].mxu0
    %v586 = vadd.f32 0.0, %v585
    %v587 = vpop.f32.mrb[0].mxu0
    %588 = vmatprep.mubr.f32.mxu0 0.0
    %589 = vmatmul.mubr.f32.gmra.mrb[0].mxu0 %v299
    %v590 = vpop.f32.mrb[0].mxu0
    %v591 = vadd.f32 0.0, %v590
    %v592 = vpop.f32.mrb[0].mxu0
    %593 = vmatprep.mubr.f32.mxu0 0.0
    %594 = vmatmul.mubr.f32.gmra.mrb[0].mxu0 %v300
    %v595 = vpop.f32.mrb[0].mxu0
    %v596 = vadd.f32 0.0, %v595
    %v597 = vpop.f32.mrb[0].mxu0
    %598 = vmatprep.mubr.f32.mxu0 0.0
    %599 = vmatmul.mubr.f32.gmra.mrb[0].mxu0 %v301
    %v600 = vpop.f32.mrb[0].mxu0
    %v601 = vadd.f32 0.0, %v600
    %v602 = vpop.f32.mrb[0].mxu0
    %603 = vmatprep.mubr.f32.mxu0 0.0
    %604 = vmatmul.mubr.f32.gmra.mrb[0].mxu0 %v302
    %v605 = vpop.f32.mrb[0].mxu0
    %v606 = vadd.f32 0.0, %v605
    %v607 = vpop.f32.mrb[0].mxu0
    %608 = vmatprep.mubr.f32.mxu0 0.0
    %609 = vmatmul.mubr.f32.gmra.mrb[0].mxu0 %v303
    %v610 = vpop.f32.mrb[0].mxu0
    %v611 = vadd.f32 0.0, %v610
    %v612 = vpop.f32.mrb[0].mxu0
    %613 = vmatprep.mubr.f32.mxu0 0.0
    %614 = vmatmul.mubr.f32.gmra.mrb[0].mxu0 %v304
    %v615 = vpop.f32.mrb[0].mxu0
    %v616 = vadd.f32 0.0, %v615
    %v617 = vpop.f32.mrb[0].mxu0
    %618 = vmatprep.mubr.f32.mxu0 0.0
    %619 = vmatmul.mubr.f32.gmra.mrb[0].mxu0 %v305
    %v620 = vpop.f32.mrb[0].mxu0
    %v621 = vadd.f32 0.0, %v620
    %v622 = vpop.f32.mrb[0].mxu0
    %623 = vmatprep.mubr.f32.mxu0 0.0
    %624 = vmatmul.mubr.f32.gmra.mrb[0].mxu0 %v306
    %v625 = vpop.f32.mrb[0].mxu0
    %v626 = vadd.f32 0.0, %v625
    %v627 = vpop.f32.mrb[0].mxu0
    %628 = vdwg.mxu0
    %v629 = vld [vmem:[#allocation11] sm:$0xff]
    %v630 = vld [vmem:[#allocation11 + $0x8] sm:$0xff]
    %v631 = vld [vmem:[#allocation11 + $0x10] sm:$0xff]
    %v632 = vld [vmem:[#allocation11 + $0x18] sm:$0xff]
    %v633 = vld [vmem:[#allocation11 + $0x20] sm:$0xff]
    %v634 = vld [vmem:[#allocation11 + $0x28] sm:$0xff]
    %v635 = vld [vmem:[#allocation11 + $0x30] sm:$0xff]
    %v636 = vld [vmem:[#allocation11 + $0x38] sm:$0xff]
    %v637 = vld [vmem:[#allocation11 + $0x40] sm:$0xff]
    %v638 = vld [vmem:[#allocation11 + $0x48] sm:$0xff]
    %v639 = vld [vmem:[#allocation11 + $0x50] sm:$0xff]
    %v640 = vld [vmem:[#allocation11 + $0x58] sm:$0xff]
    %v641 = vld [vmem:[#allocation11 + $0x60] sm:$0xff]
    %v642 = vld [vmem:[#allocation11 + $0x68] sm:$0xff]
    %v643 = vld [vmem:[#allocation11 + $0x70] sm:$0xff]
    %v644 = vld [vmem:[#allocation11 + $0x78] sm:$0xff]
    %645 = vmatprep.subr.mxu0 0.0
    %646 = vmatpush1.xpose.msra.mxu0 %v291
    %647 = vmatprep.subr.mxu0 0.0
    %648 = vmatpush1.xpose.msra.mxu0 %v292
    %649 = vmatprep.subr.mxu0 0.0
    %650 = vmatpush1.xpose.msra.mxu0 %v293
    %651 = vmatprep.subr.mxu0 0.0
    %652 = vmatpush1.xpose.msra.mxu0 %v294
    %653 = vmatprep.subr.mxu0 0.0
    %654 = vmatpush1.xpose.msra.mxu0 %v295
    %655 = vmatprep.subr.mxu0 0.0
    %656 = vmatpush1.xpose.msra.mxu0 %v296
    %657 = vmatprep.subr.mxu0 0.0
    %658 = vmatpush1.xpose.msra.mxu0 %v297
    %659 = vmatprep.subr.mxu0 0.0
    %660 = vmatpush1.xpose.msra.mxu0 %v298
    %661 = vmatprep.subr.mxu0 0.0
    %662 = vmatpush1.xpose.msra.mxu0 %v299
    %663 = vmatprep.subr.mxu0 0.0
    %664 = vmatpush1.xpose.msra.mxu0 %v300
    %665 = vmatprep.subr.mxu0 0.0
    %666 = vmatpush1.xpose.msra.mxu0 %v301
    %667 = vmatprep.subr.mxu0 0.0
    %668 = vmatpush1.xpose.msra.mxu0 %v302
    %669 = vmatprep.subr.mxu0 0.0
    %670 = vmatpush1.xpose.msra.mxu0 %v303
    %671 = vmatprep.subr.mxu0 0.0
    %672 = vmatpush1.xpose.msra.mxu0 %v304
    %673 = vmatprep.subr.mxu0 0.0
    %674 = vmatpush1.xpose.msra.mxu0 %v305
    %675 = vmatprep.subr.mxu0 0.0
    %676 = vmatpush1.xpose.msra.mxu0 %v306
    %677 = vmatprep.subr.mxu0 0.0
    %678 = vmatpush1.xpose.msra.mxu0 0.0
    %679 = vmatprep.subr.mxu0 0.0
    %680 = vmatpush1.xpose.msra.mxu0 0.0
    %681 = vmatprep.subr.mxu0 0.0
    %682 = vmatpush1.xpose.msra.mxu0 0.0
    %683 = vmatprep.subr.mxu0 0.0
    %684 = vmatpush1.xpose.msra.mxu0 0.0
    %685 = vmatprep.subr.mxu0 0.0
    %686 = vmatpush1.xpose.msra.mxu0 0.0
    %687 = vmatprep.subr.mxu0 0.0
    %688 = vmatpush1.xpose.msra.mxu0 0.0
    %689 = vmatprep.subr.mxu0 0.0
    %690 = vmatpush1.xpose.msra.mxu0 0.0
    %691 = vmatprep.subr.mxu0 0.0
    %692 = vmatpush1.xpose.msra.mxu0 0.0
    %693 = vmatprep.subr.mxu0 0.0
    %694 = vmatpush1.xpose.msra.mxu0 0.0
    %695 = vmatprep.subr.mxu0 0.0
    %696 = vmatpush1.xpose.msra.mxu0 0.0
    %697 = vmatprep.subr.mxu0 0.0
    %698 = vmatpush1.xpose.msra.mxu0 0.0
    %699 = vmatprep.subr.mxu0 0.0
    %700 = vmatpush1.xpose.msra.mxu0 0.0
    %701 = vmatprep.subr.mxu0 0.0
    %702 = vmatpush1.xpose.msra.mxu0 0.0
    %703 = vmatprep.subr.mxu0 0.0
    %704 = vmatpush1.xpose.msra.mxu0 0.0
    %705 = vmatprep.subr.mxu0 0.0
    %706 = vmatpush1.xpose.msra.mxu0 0.0
    %707 = vmatprep.subr.mxu0 0.0
    %708 = vmatpush1.xpose.msra.mxu0 0.0
    %709 = vmatprep.mubr.f32.mxu0 0.0
    %710 = vmatmul.mubr.f32.gmra.mrb[0].mxu0 %v551
    %v711 = vpop.f32.mrb[0].mxu0
    %v712 = vadd.f32 %v629, %v711
    %v713 = vpop.f32.mrb[0].mxu0
    %714 = vmatprep.mubr.f32.mxu0 0.0
    %715 = vmatmul.mubr.f32.gmra.mrb[0].mxu0 %v556
    %v716 = vpop.f32.mrb[0].mxu0
    %v717 = vadd.f32 %v630, %v716
    %v718 = vpop.f32.mrb[0].mxu0
    %719 = vmatprep.mubr.f32.mxu0 0.0
    %720 = vmatmul.mubr.f32.gmra.mrb[0].mxu0 %v561
    %v721 = vpop.f32.mrb[0].mxu0
    %v722 = vadd.f32 %v631, %v721
    %v723 = vpop.f32.mrb[0].mxu0
    %724 = vmatprep.mubr.f32.mxu0 0.0
    %725 = vmatmul.mubr.f32.gmra.mrb[0].mxu0 %v566
    %v726 = vpop.f32.mrb[0].mxu0
    %v727 = vadd.f32 %v632, %v726
    %v728 = vpop.f32.mrb[0].mxu0
    %729 = vmatprep.mubr.f32.mxu0 0.0
    %730 = vmatmul.mubr.f32.gmra.mrb[0].mxu0 %v571
    %v731 = vpop.f32.mrb[0].mxu0
    %v732 = vadd.f32 %v633, %v731
    %v733 = vpop.f32.mrb[0].mxu0
    %734 = vmatprep.mubr.f32.mxu0 0.0
    %735 = vmatmul.mubr.f32.gmra.mrb[0].mxu0 %v576
    %v736 = vpop.f32.mrb[0].mxu0
    %v737 = vadd.f32 %v634, %v736
    %v738 = vpop.f32.mrb[0].mxu0
    %739 = vmatprep.mubr.f32.mxu0 0.0
    %740 = vmatmul.mubr.f32.gmra.mrb[0].mxu0 %v581
    %v741 = vpop.f32.mrb[0].mxu0
    %v742 = vadd.f32 %v635, %v741
    %v743 = vpop.f32.mrb[0].mxu0
    %744 = vmatprep.mubr.f32.mxu0 0.0
    %745 = vmatmul.mubr.f32.gmra.mrb[0].mxu0 %v586
    %v746 = vpop.f32.mrb[0].mxu0
    %v747 = vadd.f32 %v636, %v746
    %v748 = vpop.f32.mrb[0].mxu0
    %749 = vmatprep.mubr.f32.mxu0 0.0
    %750 = vmatmul.mubr.f32.gmra.mrb[0].mxu0 %v591
    %v751 = vpop.f32.mrb[0].mxu0
    %v752 = vadd.f32 %v637, %v751
    %v753 = vpop.f32.mrb[0].mxu0
    %754 = vmatprep.mubr.f32.mxu0 0.0
    %755 = vmatmul.mubr.f32.gmra.mrb[0].mxu0 %v596
    %v756 = vpop.f32.mrb[0].mxu0
    %v757 = vadd.f32 %v638, %v756
    %v758 = vpop.f32.mrb[0].mxu0
    %759 = vmatprep.mubr.f32.mxu0 0.0
    %760 = vmatmul.mubr.f32.gmra.mrb[0].mxu0 %v601
    %v761 = vpop.f32.mrb[0].mxu0
    %v762 = vadd.f32 %v639, %v761
    %v763 = vpop.f32.mrb[0].mxu0
    %764 = vmatprep.mubr.f32.mxu0 0.0
    %765 = vmatmul.mubr.f32.gmra.mrb[0].mxu0 %v606
    %v766 = vpop.f32.mrb[0].mxu0
    %v767 = vadd.f32 %v640, %v766
    %v768 = vpop.f32.mrb[0].mxu0
    %769 = vmatprep.mubr.f32.mxu0 0.0
    %770 = vmatmul.mubr.f32.gmra.mrb[0].mxu0 %v611
    %v771 = vpop.f32.mrb[0].mxu0
    %v772 = vadd.f32 %v641, %v771
    %v773 = vpop.f32.mrb[0].mxu0
    %774 = vmatprep.mubr.f32.mxu0 0.0
    %775 = vmatmul.mubr.f32.gmra.mrb[0].mxu0 %v616
    %v776 = vpop.f32.mrb[0].mxu0
    %v777 = vadd.f32 %v642, %v776
    %v778 = vpop.f32.mrb[0].mxu0
    %779 = vmatprep.mubr.f32.mxu0 0.0
    %780 = vmatmul.mubr.f32.gmra.mrb[0].mxu0 %v621
    %v781 = vpop.f32.mrb[0].mxu0
    %v782 = vadd.f32 %v643, %v781
    %v783 = vpop.f32.mrb[0].mxu0
    %784 = vmatprep.mubr.f32.mxu0 0.0
    %785 = vmatmul.mubr.f32.gmra.mrb[0].mxu0 %v626
    %v786 = vpop.f32.mrb[0].mxu0
    %v787 = vadd.f32 %v644, %v786
    %v788 = vpop.f32.mrb[0].mxu0
    %789 = vdwg.mxu0
    %790 = vmax.xlane.f32.xlu0 %v712
    %v791 = vpop.xlane.xlu0 %790
    %792 = vmax.xlane.f32.xlu0 %v717
    %v793 = vpop.xlane.xlu0 %792
    %794 = vmax.xlane.f32.xlu0 %v722
    %v795 = vpop.xlane.xlu0 %794
    %796 = vmax.xlane.f32.xlu0 %v727
    %v797 = vpop.xlane.xlu0 %796
    %798 = vmax.xlane.f32.xlu0 %v732
    %v799 = vpop.xlane.xlu0 %798
    %800 = vmax.xlane.f32.xlu0 %v737
    %v801 = vpop.xlane.xlu0 %800
    %802 = vmax.xlane.f32.xlu0 %v742
    %v803 = vpop.xlane.xlu0 %802
    %804 = vmax.xlane.f32.xlu0 %v747
    %v805 = vpop.xlane.xlu0 %804
    %806 = vmax.xlane.f32.xlu0 %v752
    %v807 = vpop.xlane.xlu0 %806
    %808 = vmax.xlane.f32.xlu0 %v757
    %v809 = vpop.xlane.xlu0 %808
    %810 = vmax.xlane.f32.xlu0 %v762
    %v811 = vpop.xlane.xlu0 %810
    %812 = vmax.xlane.f32.xlu0 %v767
    %v813 = vpop.xlane.xlu0 %812
    %814 = vmax.xlane.f32.xlu0 %v772
    %v815 = vpop.xlane.xlu0 %814
    %816 = vmax.xlane.f32.xlu0 %v777
    %v817 = vpop.xlane.xlu0 %816
    %818 = vmax.xlane.f32.xlu0 %v782
    %v819 = vpop.xlane.xlu0 %818
    %820 = vmax.xlane.f32.xlu0 %v787
    %v821 = vpop.xlane.xlu0 %820
    %v822 = vsub.f32 %v712, %v791
    %v823 = vsub.f32 %v717, %v793
    %v824 = vsub.f32 %v722, %v795
    %v825 = vsub.f32 %v727, %v797
    %v826 = vsub.f32 %v732, %v799
    %v827 = vsub.f32 %v737, %v801
    %v828 = vsub.f32 %v742, %v803
    %v829 = vsub.f32 %v747, %v805
    %v830 = vsub.f32 %v752, %v807
    %v831 = vsub.f32 %v757, %v809
    %v832 = vsub.f32 %v762, %v811
    %v833 = vsub.f32 %v767, %v813
    %v834 = vsub.f32 %v772, %v815
    %v835 = vsub.f32 %v777, %v817
    %v836 = vsub.f32 %v782, %v819
    %v837 = vsub.f32 %v787, %v821
    %v838 = vmul.f32 %v822, 1.442695
    %v839 = vpow.pop %v838
    %v840 = vmul.f32 %v823, 1.442695
    %v841 = vpow.pop %v840
    %v842 = vmul.f32 %v824, 1.442695
    %v843 = vpow.pop %v842
    %v844 = vmul.f32 %v825, 1.442695
    %v845 = vpow.pop %v844
    %v846 = vmul.f32 %v826, 1.442695
    %v847 = vpow.pop %v846
    %v848 = vmul.f32 %v827, 1.442695
    %v849 = vpow.pop %v848
    %v850 = vmul.f32 %v828, 1.442695
    %v851 = vpow.pop %v850
    %v852 = vmul.f32 %v829, 1.442695
    %v853 = vpow.pop %v852
    %v854 = vmul.f32 %v830, 1.442695
    %v855 = vpow.pop %v854
    %v856 = vmul.f32 %v831, 1.442695
    %v857 = vpow.pop %v856
    %v858 = vmul.f32 %v832, 1.442695
    %v859 = vpow.pop %v858
    %v860 = vmul.f32 %v833, 1.442695
    %v861 = vpow.pop %v860
    %v862 = vmul.f32 %v834, 1.442695
    %v863 = vpow.pop %v862
    %v864 = vmul.f32 %v835, 1.442695
    %v865 = vpow.pop %v864
    %v866 = vmul.f32 %v836, 1.442695
    %v867 = vpow.pop %v866
    %v868 = vmul.f32 %v837, 1.442695
    %v869 = vpow.pop %v868
    %870 = vadd.xlane.f32.xlu0 %v839
    %v871 = vpop.xlane.xlu0 %870
    %872 = vadd.xlane.f32.xlu0 %v841
    %v873 = vpop.xlane.xlu0 %872
    %874 = vadd.xlane.f32.xlu0 %v843
    %v875 = vpop.xlane.xlu0 %874
    %876 = vadd.xlane.f32.xlu0 %v845
    %v877 = vpop.xlane.xlu0 %876
    %878 = vadd.xlane.f32.xlu0 %v847
    %v879 = vpop.xlane.xlu0 %878
    %880 = vadd.xlane.f32.xlu0 %v849
    %v881 = vpop.xlane.xlu0 %880
    %882 = vadd.xlane.f32.xlu0 %v851
    %v883 = vpop.xlane.xlu0 %882
    %884 = vadd.xlane.f32.xlu0 %v853
    %v885 = vpop.xlane.xlu0 %884
    %886 = vadd.xlane.f32.xlu0 %v855
    %v887 = vpop.xlane.xlu0 %886
    %888 = vadd.xlane.f32.xlu0 %v857
    %v889 = vpop.xlane.xlu0 %888
    %890 = vadd.xlane.f32.xlu0 %v859
    %v891 = vpop.xlane.xlu0 %890
    %892 = vadd.xlane.f32.xlu0 %v861
    %v893 = vpop.xlane.xlu0 %892
    %894 = vadd.xlane.f32.xlu0 %v863
    %v895 = vpop.xlane.xlu0 %894
    %896 = vadd.xlane.f32.xlu0 %v865
    %v897 = vpop.xlane.xlu0 %896
    %898 = vadd.xlane.f32.xlu0 %v867
    %v899 = vpop.xlane.xlu0 %898
    %900 = vadd.xlane.f32.xlu0 %v869
    %v901 = vpop.xlane.xlu0 %900
    %v902 = vrcp.pop %v871
    %v903 = vmul.f32 %v839, %v902
    %v904 = vrcp.pop %v873
    %v905 = vmul.f32 %v841, %v904
    %v906 = vrcp.pop %v875
    %v907 = vmul.f32 %v843, %v906
    %v908 = vrcp.pop %v877
    %v909 = vmul.f32 %v845, %v908
    %v910 = vrcp.pop %v879
    %v911 = vmul.f32 %v847, %v910
    %v912 = vrcp.pop %v881
    %v913 = vmul.f32 %v849, %v912
    %v914 = vrcp.pop %v883
    %v915 = vmul.f32 %v851, %v914
    %v916 = vrcp.pop %v885
    %v917 = vmul.f32 %v853, %v916
    %v918 = vrcp.pop %v887
    %v919 = vmul.f32 %v855, %v918
    %v920 = vrcp.pop %v889
    %v921 = vmul.f32 %v857, %v920
    %v922 = vrcp.pop %v891
    %v923 = vmul.f32 %v859, %v922
    %v924 = vrcp.pop %v893
    %v925 = vmul.f32 %v861, %v924
    %v926 = vrcp.pop %v895
    %v927 = vmul.f32 %v863, %v926
    %v928 = vrcp.pop %v897
    %v929 = vmul.f32 %v865, %v928
    %v930 = vrcp.pop %v899
    %v931 = vmul.f32 %v867, %v930
    %v932 = vrcp.pop %v901
    %v933 = vmul.f32 %v869, %v932
    %934 = vmatprep.subr.mxu0 0.0
    %935 = vmatpush1.msra.mxu0 %v390
    %936 = vmatprep.subr.mxu0 0.0
    %937 = vmatpush1.msra.mxu0 %v395
    %938 = vmatprep.subr.mxu0 0.0
    %939 = vmatpush1.msra.mxu0 %v400
    %940 = vmatprep.subr.mxu0 0.0
    %941 = vmatpush1.msra.mxu0 %v405
    %942 = vmatprep.subr.mxu0 0.0
    %943 = vmatpush1.msra.mxu0 %v410
    %944 = vmatprep.subr.mxu0 0.0
    %945 = vmatpush1.msra.mxu0 %v415
    %946 = vmatprep.subr.mxu0 0.0
    %947 = vmatpush1.msra.mxu0 %v420
    %948 = vmatprep.subr.mxu0 0.0
    %949 = vmatpush1.msra.mxu0 %v425
    %950 = vmatprep.subr.mxu0 0.0
    %951 = vmatpush1.msra.mxu0 %v430
    %952 = vmatprep.subr.mxu0 0.0
    %953 = vmatpush1.msra.mxu0 %v435
    %954 = vmatprep.subr.mxu0 0.0
    %955 = vmatpush1.msra.mxu0 %v440
    %956 = vmatprep.subr.mxu0 0.0
    %957 = vmatpush1.msra.mxu0 %v445
    %958 = vmatprep.subr.mxu0 0.0
    %959 = vmatpush1.msra.mxu0 %v450
    %960 = vmatprep.subr.mxu0 0.0
    %961 = vmatpush1.msra.mxu0 %v455
    %962 = vmatprep.subr.mxu0 0.0
    %963 = vmatpush1.msra.mxu0 %v460
    %964 = vmatprep.subr.mxu0 0.0
    %965 = vmatpush1.msra.mxu0 %v465
    %966 = vmatprep.subr.mxu0 0.0
    %967 = vmatpush1.msra.mxu0 0.0
    %968 = vmatprep.subr.mxu0 0.0
    %969 = vmatpush1.msra.mxu0 0.0
    %970 = vmatprep.subr.mxu0 0.0
    %971 = vmatpush1.msra.mxu0 0.0
    %972 = vmatprep.subr.mxu0 0.0
    %973 = vmatpush1.msra.mxu0 0.0
    %974 = vmatprep.subr.mxu0 0.0
    %975 = vmatpush1.msra.mxu0 0.0
    %976 = vmatprep.subr.mxu0 0.0
    %977 = vmatpush1.msra.mxu0 0.0
    %978 = vmatprep.subr.mxu0 0.0
    %979 = vmatpush1.msra.mxu0 0.0
    %980 = vmatprep.subr.mxu0 0.0
    %981 = vmatpush1.msra.mxu0 0.0
    %982 = vmatprep.subr.mxu0 0.0
    %983 = vmatpush1.msra.mxu0 0.0
    %984 = vmatprep.subr.mxu0 0.0
    %985 = vmatpush1.msra.mxu0 0.0
    %986 = vmatprep.subr.mxu0 0.0
    %987 = vmatpush1.msra.mxu0 0.0
    %988 = vmatprep.subr.mxu0 0.0
    %989 = vmatpush1.msra.mxu0 0.0
    %990 = vmatprep.subr.mxu0 0.0
    %991 = vmatpush1.msra.mxu0 0.0
    %992 = vmatprep.subr.mxu0 0.0
    %993 = vmatpush1.msra.mxu0 0.0
    %994 = vmatprep.subr.mxu0 0.0
    %995 = vmatpush1.msra.mxu0 0.0
    %996 = vmatprep.subr.mxu0 0.0
    %997 = vmatpush1.msra.mxu0 0.0
    %998 = vmatprep.mubr.f32.mxu0 0.0
    %999 = vmatmul.mubr.f32.gmra.mrb[0].mxu0 %v903
    %v1000 = vpop.f32.mrb[0].mxu0
    %v1001 = vadd.f32 0.0, %v1000
    %v1002 = vpop.f32.mrb[0].mxu0
    %1003 = vmatprep.mubr.f32.mxu0 0.0
    %1004 = vmatmul.mubr.f32.gmra.mrb[0].mxu0 %v905
    %v1005 = vpop.f32.mrb[0].mxu0
    %v1006 = vadd.f32 0.0, %v1005
    %v1007 = vpop.f32.mrb[0].mxu0
    %1008 = vmatprep.mubr.f32.mxu0 0.0
    %1009 = vmatmul.mubr.f32.gmra.mrb[0].mxu0 %v907
    %v1010 = vpop.f32.mrb[0].mxu0
    %v1011 = vadd.f32 0.0, %v1010
    %v1012 = vpop.f32.mrb[0].mxu0
    %1013 = vmatprep.mubr.f32.mxu0 0.0
    %1014 = vmatmul.mubr.f32.gmra.mrb[0].mxu0 %v909
    %v1015 = vpop.f32.mrb[0].mxu0
    %v1016 = vadd.f32 0.0, %v1015
    %v1017 = vpop.f32.mrb[0].mxu0
    %1018 = vmatprep.mubr.f32.mxu0 0.0
    %1019 = vmatmul.mubr.f32.gmra.mrb[0].mxu0 %v911
    %v1020 = vpop.f32.mrb[0].mxu0
    %v1021 = vadd.f32 0.0, %v1020
    %v1022 = vpop.f32.mrb[0].mxu0
    %1023 = vmatprep.mubr.f32.mxu0 0.0
    %1024 = vmatmul.mubr.f32.gmra.mrb[0].mxu0 %v913
    %v1025 = vpop.f32.mrb[0].mxu0
    %v1026 = vadd.f32 0.0, %v1025
    %v1027 = vpop.f32.mrb[0].mxu0
    %1028 = vmatprep.mubr.f32.mxu0 0.0
    %1029 = vmatmul.mubr.f32.gmra.mrb[0].mxu0 %v915
    %v1030 = vpop.f32.mrb[0].mxu0
    %v1031 = vadd.f32 0.0, %v1030
    %v1032 = vpop.f32.mrb[0].mxu0
    %1033 = vmatprep.mubr.f32.mxu0 0.0
    %1034 = vmatmul.mubr.f32.gmra.mrb[0].mxu0 %v917
    %v1035 = vpop.f32.mrb[0].mxu0
    %v1036 = vadd.f32 0.0, %v1035
    %v1037 = vpop.f32.mrb[0].mxu0
    %1038 = vmatprep.mubr.f32.mxu0 0.0
    %1039 = vmatmul.mubr.f32.gmra.mrb[0].mxu0 %v919
    %v1040 = vpop.f32.mrb[0].mxu0
    %v1041 = vadd.f32 0.0, %v1040
    %v1042 = vpop.f32.mrb[0].mxu0
    %1043 = vmatprep.mubr.f32.mxu0 0.0
    %1044 = vmatmul.mubr.f32.gmra.mrb[0].mxu0 %v921
    %v1045 = vpop.f32.mrb[0].mxu0
    %v1046 = vadd.f32 0.0, %v1045
    %v1047 = vpop.f32.mrb[0].mxu0
    %1048 = vmatprep.mubr.f32.mxu0 0.0
    %1049 = vmatmul.mubr.f32.gmra.mrb[0].mxu0 %v923
    %v1050 = vpop.f32.mrb[0].mxu0
    %v1051 = vadd.f32 0.0, %v1050
    %v1052 = vpop.f32.mrb[0].mxu0
    %1053 = vmatprep.mubr.f32.mxu0 0.0
    %1054 = vmatmul.mubr.f32.gmra.mrb[0].mxu0 %v925
    %v1055 = vpop.f32.mrb[0].mxu0
    %v1056 = vadd.f32 0.0, %v1055
    %v1057 = vpop.f32.mrb[0].mxu0
    %1058 = vmatprep.mubr.f32.mxu0 0.0
    %1059 = vmatmul.mubr.f32.gmra.mrb[0].mxu0 %v927
    %v1060 = vpop.f32.mrb[0].mxu0
    %v1061 = vadd.f32 0.0, %v1060
    %v1062 = vpop.f32.mrb[0].mxu0
    %1063 = vmatprep.mubr.f32.mxu0 0.0
    %1064 = vmatmul.mubr.f32.gmra.mrb[0].mxu0 %v929
    %v1065 = vpop.f32.mrb[0].mxu0
    %v1066 = vadd.f32 0.0, %v1065
    %v1067 = vpop.f32.mrb[0].mxu0
    %1068 = vmatprep.mubr.f32.mxu0 0.0
    %1069 = vmatmul.mubr.f32.gmra.mrb[0].mxu0 %v931
    %v1070 = vpop.f32.mrb[0].mxu0
    %v1071 = vadd.f32 0.0, %v1070
    %v1072 = vpop.f32.mrb[0].mxu0
    %1073 = vmatprep.mubr.f32.mxu0 0.0
    %1074 = vmatmul.mubr.f32.gmra.mrb[0].mxu0 %v933
    %v1075 = vpop.f32.mrb[0].mxu0
    %v1076 = vadd.f32 0.0, %v1075
    %v1077 = vpop.f32.mrb[0].mxu0
    %1078 = vdwg.mxu0
    %v1079 = vld [vmem:[%s4] sm:$0x1]
    %v1081 = vlaneseq
    %v1082 = vshrl.u32 %v1081, 7
    %v1083 = vsub.s32 0, %v1082
    %v1084 = vrot.slane %v1079, %v1083
    %v1086 = vadd.f32 %v1001, %v1084
    %v1087 = vadd.f32 %v1006, %v1084
    %v1088 = vadd.f32 %v1011, %v1084
    %v1089 = vadd.f32 %v1016, %v1084
    %v1090 = vadd.f32 %v1086, %v1021
    %v1091 = vadd.f32 %v1087, %v1026
    %v1092 = vadd.f32 %v1088, %v1031
    %v1093 = vadd.f32 %v1089, %v1036
    %v1094 = vadd.f32 %v1090, %v1041
    %v1095 = vadd.f32 %v1091, %v1046
    %v1096 = vadd.f32 %v1092, %v1051
    %v1097 = vadd.f32 %v1093, %v1056
    %v1098 = vadd.f32 %v1094, %v1061
    %v1099 = vadd.f32 %v1095, %v1066
    %v1100 = vadd.f32 %v1096, %v1071
    %v1101 = vadd.f32 %v1097, %v1076
    %1102 = vst [vmem:[#allocation13] sm:$0xff] %v1098
    %1103 = vst [vmem:[#allocation13 + $0x8] sm:$0xff] %v1099
    %1104 = vst [vmem:[#allocation13 + $0x10] sm:$0xff] %v1100
    %1105 = vst [vmem:[#allocation13 + $0x18] sm:$0xff] %v1101
    // Predicated region
    $region54: #{attention_pallas.1} parent=1 // pred_check
      _
    $region55: #{attention_pallas.1} parent=1 // pred_check_branch
      %1107 = sbr.rel (0) target = $region57
    $region56: #{attention_pallas.1} parent=1 // pred_region
      %s1109 = ssub.s32 512, 512
      %1110 = vsyncadd [#allocation4], %s1109
      %s1111 = sshll.u32 [#allocation13], 4
      %s1112 = int_to_ptr.vmem [resolvable:$true] %s1111
      %1117 = dma.vmem_to_hbm [thread:$0]  %s1112, 512, %s7, [#allocation4], 128, 128, 8
    $region57: #{attention_pallas.1} parent=1 // pred_fallthru
      _
    // Predicated region
    $region58: #{attention_pallas.1} parent=1 // pred_check
      _
    $region59: #{attention_pallas.1} parent=1 // pred_check_branch
      %1119 = sbr.rel (0) target = $region61
    $region60: #{attention_pallas.1} parent=1 // pred_region
      %1120 = dma.done [#allocation4], 512
    $region61: #{attention_pallas.1} parent=1 // pred_fallthru
      _
    %1121 = vsyncpa [#allocation3], 1
    %1122 = vsyncpa [#allocation6], 1
    %1123 = vsyncpa [#allocation9], 1
    %1124 = vsyncpa [#allocation12], 1
    %1125 = vsyncpa [#allocation4], 1

</llo_original>
